<compile_context>
chip_gen: v5e
topology: v5e:2x2
jax: 0.10.0
libtpu: 0.0.40
codegen_flags: <defaults>
</compile_context>

<pallas_src>
import functools

import jax
import jax.numpy as jnp
from jax.experimental import pallas as pl
from jax.experimental.pallas import tpu as pltpu

LN_EPS = 1e-5  # nn.LayerNorm default
_MIB = 1024 * 1024


def msa_kernel(x_ref, wqkv_t_ref, bqkv_ref, wo_t_ref, bo_ref, o_ref,
               qkv_ref, attn_ref, *, num_heads, seq_len, heads_per_group):
    Bblk, S_pad, E = x_ref.shape
    Dh = E // num_heads
    Gw = heads_per_group * Dh                     # lane width of one head group

    # ---- LayerNorm (affine folded into the QKV weights in the wrapper) ----
    x = x_ref[...].astype(jnp.float32).reshape(Bblk * S_pad, E)
    mean = jnp.mean(x, axis=-1, keepdims=True)
    var = jnp.mean(jnp.square(x - mean), axis=-1, keepdims=True)
    z = (x - mean) * jax.lax.rsqrt(var + LN_EPS)

    # ---- packed QKV projection; gamma/beta and 1/sqrt(Dh) pre-folded ----
    qkv = jnp.dot(z.astype(jnp.bfloat16), wqkv_t_ref[...],
                  preferred_element_type=jnp.float32) + bqkv_ref[0]
    qkv_ref[...] = qkv.astype(jnp.bfloat16)       # single bf16 cast, staged in VMEM

    # Additive mask for padded key columns (S_pad / seq_len are static ints).
    if S_pad > seq_len:
        key_ids = jax.lax.broadcasted_iota(jnp.int32, (1, S_pad), 1)
        key_bias = jnp.where(key_ids < seq_len, 0.0, -1e30).astype(jnp.float32)
    else:
        key_bias = None

    nt_dims = (((1,), (1,)), ((), ()))            # q @ k^T, contract last dims

    def batch_body(b, carry):
        r = pl.multiple_of(b * S_pad, S_pad)      # sublane-aligned row offset
        for g in range(num_heads // heads_per_group):
            cg = g * Gw
            qg = qkv_ref[pl.ds(r, S_pad), cg:cg + Gw]
            kg = qkv_ref[pl.ds(r, S_pad), E + cg:E + cg + Gw]
            vg = qkv_ref[pl.ds(r, S_pad), 2 * E + cg:2 * E + cg + Gw]
            outs = []
            for h in range(heads_per_group):      # small static unroll only
                c = h * Dh
                s = jax.lax.dot_general(qg[:, c:c + Dh], kg[:, c:c + Dh], nt_dims,
                                        preferred_element_type=jnp.float32)
                if key_bias is not None:
                    s = s + key_bias
                s = s - jnp.max(s, axis=-1, keepdims=True)
                p = jnp.exp(s)
                p = p * pl.reciprocal(jnp.sum(p, axis=-1, keepdims=True), approx=True)
                outs.append(jnp.dot(p.astype(jnp.bfloat16), vg[:, c:c + Dh],
                                    preferred_element_type=jnp.float32))
            og = outs[0] if len(outs) == 1 else jnp.concatenate(outs, axis=-1)
            # Lane-dense store of the whole head group at an aligned column.
            attn_ref[pl.ds(r, S_pad), cg:cg + Gw] = og.astype(attn_ref.dtype)
        return carry

    jax.lax.fori_loop(0, Bblk, batch_body, jnp.int32(0))

    # ---- output projection on the full (Bblk*S_pad, E) slab ----
    out = jnp.dot(attn_ref[...], wo_t_ref[...],
                  preferred_element_type=jnp.float32) + bo_ref[0]
    o_ref[...] = out.reshape(Bblk, S_pad, E).astype(o_ref.dtype)


def _vmem_capacity_bytes():
    """Physical VMEM per TensorCore (used to pick block_b / vmem_limit)."""
    try:
        return int(pltpu.get_tpu_info().vmem_capacity_bytes)
    except Exception:
        pass
    try:
        if "v7" in jax.devices()[0].device_kind.lower():
            return 64 * _MIB
    except Exception:
        pass
    return 128 * _MIB


def _pick_block_b(B, cap):
    """Largest divisor of B <= cap, keeping >=4 grid steps when B allows
    (>=2 steps per v7x TensorCore so the auto-pipeline can hide the DMAs)."""
    if B >= 4:
        cap = min(cap, B // 4)
    elif B >= 2:
        cap = min(cap, B // 2)
    bb = max(1, min(B, cap))
    while B % bb:
        bb -= 1
    return bb


def _heads_per_group(num_heads, head_dim):
    """Heads per lane-aligned store group (2 for ViT-Base Dh=64 -> 128 lanes)."""
    if num_heads * head_dim <= 128:
        return num_heads
    if 128 % head_dim == 0:
        g = 128 // head_dim
        if num_heads % g == 0:
            return g
    return 1


def msa_block(x, gamma, beta, wqkv, bqkv, wo, bo, *, num_heads, block_b=None):
    B, S, E = x.shape
    assert E % num_heads == 0
    Dh = E // num_heads

    # Pad S to a bf16-sublane-friendly multiple of 16 (e.g. 197 -> 208).
    S_pad = -(-S // 16) * 16
    x_p = jnp.pad(x, ((0, 0), (0, S_pad - S), (0, 0))) if S_pad != S else x

    # ---- one-time host-side folding of LN affine + 1/sqrt(Dh) scale ----
    gamma_v = gamma.reshape(E).astype(jnp.float32)
    beta_v = beta.reshape(E).astype(jnp.float32)
    wqkv_f32 = wqkv.astype(jnp.float32)
    wqkv_t = wqkv_f32.T * gamma_v[:, None]                        # (E, 3E)
    bqkv_f = bqkv.reshape(3 * E).astype(jnp.float32) + beta_v @ wqkv_f32.T
    scale = 1.0 / jnp.sqrt(jnp.float32(Dh))
    q_scale = jnp.concatenate([jnp.full((E,), scale, jnp.float32),
                               jnp.ones((2 * E,), jnp.float32)])
    wqkv_t = (wqkv_t * q_scale[None, :]).astype(jnp.bfloat16)     # MXU-ready
    bqkv_f = (bqkv_f * q_scale).reshape(1, 3 * E)
    wo_t = wo.T.astype(jnp.bfloat16)
    bo_f = bo.reshape(1, E).astype(jnp.float32)

    # ---- generation-aware batch block / VMEM limit ----
    vmem_cap = _vmem_capacity_bytes()
    small_vmem = vmem_cap <= 64 * _MIB                            # v7x
    if block_b is None:
        block_b = _pick_block_b(B, 4 if small_vmem else 8)
    assert B % block_b == 0
    vmem_limit = int(min(max(vmem_cap - 12 * _MIB, 32 * _MIB), 100 * _MIB))

    hg = _heads_per_group(num_heads, Dh)
    kernel = functools.partial(msa_kernel, num_heads=num_heads, seq_len=S,
                               heads_per_group=hg)
    const = dict(pipeline_mode=pl.Buffered(1))   # constant operands: single-buffer

    out = pl.pallas_call(
        kernel,
        out_shape=jax.ShapeDtypeStruct((B, S_pad, E), x.dtype),
        grid=(B // block_b,),
        in_specs=[
            pl.BlockSpec((block_b, S_pad, E), lambda b: (b, 0, 0)),        # x
            pl.BlockSpec((E, 3 * E), lambda b: (0, 0), **const),  # folded W_qkv^T (bf16)
            pl.BlockSpec((1, 3 * E), lambda b: (0, 0), **const),  # folded qkv bias (f32)
            pl.BlockSpec((E, E), lambda b: (0, 0), **const),      # out_proj.weight^T (bf16)
            pl.BlockSpec((1, E), lambda b: (0, 0), **const),      # out_proj.bias (f32)
        ],
        out_specs=pl.BlockSpec((block_b, S_pad, E), lambda b: (b, 0, 0)),
        scratch_shapes=[
            pltpu.VMEM((block_b * S_pad, 3 * E), jnp.bfloat16),   # packed qkv (bf16)
            pltpu.VMEM((block_b * S_pad, E), jnp.bfloat16),       # per-head outputs
        ],
        compiler_params=pltpu.CompilerParams(
            dimension_semantics=("parallel",),
            vmem_limit_bytes=vmem_limit),
    )(x_p, wqkv_t, bqkv_f, wo_t, bo_f)

    return out[:, :S, :] if S_pad != S else out


def msa_reference(x, gamma, beta, wqkv, bqkv, wo, bo, *, num_heads):
    """Pure-JAX f32 reference mirroring the PyTorch MSA block semantics."""
    B, S, E = x.shape
    Dh = E // num_heads
    mean = jnp.mean(x, axis=-1, keepdims=True)
    var = jnp.mean(jnp.square(x - mean), axis=-1, keepdims=True)
    xn = (x - mean) / jnp.sqrt(var + LN_EPS) * gamma[0] + beta[0]
    qkv = xn @ wqkv.T + bqkv[0]
    q, k, v = jnp.split(qkv, 3, axis=-1)

    def heads(t):
        return t.reshape(B, S, num_heads, Dh).transpose(0, 2, 1, 3)

    qh, kh, vh = heads(q), heads(k), heads(v)
    s = jnp.einsum('bhqd,bhkd->bhqk', qh, kh) / jnp.sqrt(jnp.float32(Dh))
    p = jax.nn.softmax(s, axis=-1)
    o = jnp.einsum('bhqk,bhkd->bhqd', p, vh)
    o = o.transpose(0, 2, 1, 3).reshape(B, S, E)
    return o @ wo.T + bo[0]


if __name__ == "__main__":
    B, S, E, H = 4, 8, 32, 4   # small shapes; S=8 -> S_pad=16 exercises masking

    key = jax.random.PRNGKey(0)
    kx, kg, kb, kqkv, kbq, kwo, kbo = jax.random.split(key, 7)

    x = jax.random.normal(kx, (B, S, E), dtype=jnp.float32)
    # Deterministic synthetic params (shapes per nn.LayerNorm / nn.MultiheadAttention)
    gamma = 1.0 + 0.1 * jax.random.normal(kg, (1, E), dtype=jnp.float32)   # LN weight
    beta = 0.1 * jax.random.normal(kb, (1, E), dtype=jnp.float32)          # LN bias
    wqkv = 0.05 * jax.random.normal(kqkv, (3 * E, E), dtype=jnp.float32)   # in_proj_weight
    bqkv = 0.05 * jax.random.normal(kbq, (1, 3 * E), dtype=jnp.float32)    # in_proj_bias
    wo = 0.05 * jax.random.normal(kwo, (E, E), dtype=jnp.float32)          # out_proj.weight
    bo = 0.05 * jax.random.normal(kbo, (1, E), dtype=jnp.float32)          # out_proj.bias

    out = msa_block(x, gamma, beta, wqkv, bqkv, wo, bo, num_heads=H)
    out = jax.block_until_ready(out)

    ref = msa_reference(x, gamma, beta, wqkv, bqkv, wo, bo, num_heads=H)
    assert out.shape == (B, S, E)
    # bf16 matmul operands with f32 accumulation -> relaxed tolerance vs f32 reference
    assert jnp.allclose(out, ref, atol=2e-2, rtol=2e-2), "mismatch vs reference"

    print("KERNEL_OK")
</pallas_src>

<mosaic_0001>
module attributes {stable_mosaic.version = 11 : i64} {
  func.func @msa_kernel(%arg0: i32, %arg1: memref<1x16x32xf32, #tpu.memory_space<vmem>>, %arg2: memref<32x96xbf16, #tpu.memory_space<vmem>>, %arg3: memref<1x96xf32, #tpu.memory_space<vmem>>, %arg4: memref<32x32xbf16, #tpu.memory_space<vmem>>, %arg5: memref<1x32xf32, #tpu.memory_space<vmem>>, %arg6: memref<1x16x32xf32, #tpu.memory_space<vmem>>, %arg7: memref<16x96xbf16, #tpu.memory_space<vmem>>, %arg8: memref<16x32xbf16, #tpu.memory_space<vmem>>) attributes {dimension_semantics = [#tpu.dimension_semantics<parallel>], iteration_bounds = array<i64: 4>, scalar_prefetch = 0 : i64, scratch_operands = 2 : i64, tpu.core_type = #tpu.core_type<tc>, window_params = [{transform_indices = @transform_0, window_bounds = array<i64: 1, 16, 32>}, {pipeline_mode = #tpu.pipeline_mode<synchronous>, transform_indices = @transform_1, window_bounds = array<i64: 32, 96>}, {pipeline_mode = #tpu.pipeline_mode<synchronous>, transform_indices = @transform_2, window_bounds = array<i64: 1, 96>}, {pipeline_mode = #tpu.pipeline_mode<synchronous>, transform_indices = @transform_3, window_bounds = array<i64: 32, 32>}, {pipeline_mode = #tpu.pipeline_mode<synchronous>, transform_indices = @transform_4, window_bounds = array<i64: 1, 32>}, {transform_indices = @transform_5, window_bounds = array<i64: 1, 16, 32>}]} {
    %c0 = arith.constant 0 : index
    %c0_0 = arith.constant 0 : index
    %c0_1 = arith.constant 0 : index
    %0 = vector.load %arg1[%c0, %c0_0, %c0_1] : memref<1x16x32xf32, #tpu.memory_space<vmem>>, vector<1x16x32xf32>
    %1 = vector.shape_cast %0 : vector<1x16x32xf32> to vector<16x32xf32>
    %cst = arith.constant dense<0.000000e+00> : vector<16xf32>
    %2 = vector.multi_reduction <add>, %1, %cst [1] : vector<16x32xf32> to vector<16xf32>
    %3 = vector.shape_cast %2 : vector<16xf32> to vector<16x1xf32>
    %cst_2 = arith.constant 3.200000e+01 : f32
    %4 = vector.broadcast %cst_2 : f32 to vector<16x1xf32>
    %5 = arith.divf %3, %4 : vector<16x1xf32>
    %6 = vector.broadcast %5 : vector<16x1xf32> to vector<16x32xf32>
    %7 = arith.subf %1, %6 : vector<16x32xf32>
    %8 = arith.mulf %7, %7 : vector<16x32xf32>
    %cst_3 = arith.constant dense<0.000000e+00> : vector<16xf32>
    %9 = vector.multi_reduction <add>, %8, %cst_3 [1] : vector<16x32xf32> to vector<16xf32>
    %10 = vector.shape_cast %9 : vector<16xf32> to vector<16x1xf32>
    %cst_4 = arith.constant 3.200000e+01 : f32
    %11 = vector.broadcast %cst_4 : f32 to vector<16x1xf32>
    %12 = arith.divf %10, %11 : vector<16x1xf32>
    %13 = vector.broadcast %5 : vector<16x1xf32> to vector<16x32xf32>
    %14 = arith.subf %1, %13 : vector<16x32xf32>
    %cst_5 = arith.constant 9.99999974E-6 : f32
    %15 = vector.broadcast %cst_5 : f32 to vector<16x1xf32>
    %16 = arith.addf %12, %15 : vector<16x1xf32>
    %17 = math.rsqrt %16 : vector<16x1xf32>
    %18 = vector.broadcast %17 : vector<16x1xf32> to vector<16x32xf32>
    %19 = arith.mulf %14, %18 : vector<16x32xf32>
    %20 = arith.truncf %19 : vector<16x32xf32> to vector<16x32xbf16>
    %c0_6 = arith.constant 0 : index
    %c0_7 = arith.constant 0 : index
    %21 = vector.load %arg2[%c0_6, %c0_7] : memref<32x96xbf16, #tpu.memory_space<vmem>>, vector<32x96xbf16>
    %cst_8 = arith.constant dense<0.000000e+00> : vector<16x96xf32>
    %22 = tpu.matmul %20, %21, %cst_8 {dimension_numbers = #tpu.dot_dimension_numbers<[1], [0], [0], [1], [0, 0, 1, 1], [], []>} : vector<16x32xbf16>, vector<32x96xbf16>, vector<16x96xf32> -> vector<16x96xf32>
    %c0_9 = arith.constant 0 : index
    %c0_10 = arith.constant 0 : index
    %23 = vector.load %arg3[%c0_9, %c0_10] : memref<1x96xf32, #tpu.memory_space<vmem>>, vector<1x96xf32>
    %24 = vector.shape_cast %23 : vector<1x96xf32> to vector<96xf32>
    %25 = vector.shape_cast %24 : vector<96xf32> to vector<1x96xf32>
    %26 = vector.broadcast %25 : vector<1x96xf32> to vector<16x96xf32>
    %27 = arith.addf %22, %26 : vector<16x96xf32>
    %28 = arith.truncf %27 : vector<16x96xf32> to vector<16x96xbf16>
    %c0_11 = arith.constant 0 : index
    %c0_12 = arith.constant 0 : index
    %29 = vector.load %arg7[%c0_11, %c0_12] : memref<16x96xbf16, #tpu.memory_space<vmem>>, vector<16x96xbf16>
    tpu.vector_store %arg7[%c0_11, %c0_12], %28 {strides = array<i32>} : memref<16x96xbf16, #tpu.memory_space<vmem>>, vector<16x96xbf16>,
    %30 = tpu.iota {dimensions = array<i32: 1>} : vector<1x16xi32>
    %c8_i32 = arith.constant 8 : i32
    %31 = vector.broadcast %c8_i32 : i32 to vector<1x16xi32>
    %32 = arith.cmpi slt, %30, %31 : vector<1x16xi32>
    %cst_13 = arith.constant 0.000000e+00 : f32
    %cst_14 = arith.constant -1.000000e+30 : f32
    %33 = vector.broadcast %cst_13 : f32 to vector<1x16xf32>
    %34 = vector.broadcast %cst_14 : f32 to vector<1x16xf32>
    %35 = arith.select %32, %33, %34 : vector<1x16xi1>, vector<1x16xf32>
    %c0_i32 = arith.constant 0 : i32
    %c16_i32 = arith.constant 16 : i32
    %36 = arith.muli %c0_i32, %c16_i32 : i32
    %37 = tpu.assume_multiple %36, 16 : i32
    %38 = arith.index_cast %37 : i32 to index
    %c0_15 = arith.constant 0 : index
    %39 = vector.load %arg7[%38, %c0_15] : memref<16x96xbf16, #tpu.memory_space<vmem>>, vector<16x32xbf16>
    %40 = arith.index_cast %37 : i32 to index
    %c32 = arith.constant 32 : index
    %41 = vector.load %arg7[%40, %c32] : memref<16x96xbf16, #tpu.memory_space<vmem>>, vector<16x32xbf16>
    %42 = arith.index_cast %37 : i32 to index
    %c64 = arith.constant 64 : index
    %43 = vector.load %arg7[%42, %c64] : memref<16x96xbf16, #tpu.memory_space<vmem>>, vector<16x32xbf16>
    %44 = vector.extract_strided_slice %39 {offsets = [0, 0], sizes = [16, 8], strides = [1, 1]} : vector<16x32xbf16> to vector<16x8xbf16>
    %45 = vector.extract_strided_slice %41 {offsets = [0, 0], sizes = [16, 8], strides = [1, 1]} : vector<16x32xbf16> to vector<16x8xbf16>
    %cst_16 = arith.constant dense<0.000000e+00> : vector<16x16xf32>
    %46 = tpu.matmul %44, %45, %cst_16 {dimension_numbers = #tpu.dot_dimension_numbers<[1], [1], [0], [0], [0, 0, 1, 0], [], []>} : vector<16x8xbf16>, vector<16x8xbf16>, vector<16x16xf32> -> vector<16x16xf32>
    %47 = vector.broadcast %35 : vector<1x16xf32> to vector<16x16xf32>
    %48 = arith.addf %46, %47 : vector<16x16xf32>
    %cst_17 = arith.constant dense<0xFF800000> : vector<16xf32>
    %49 = vector.multi_reduction <maximumf>, %48, %cst_17 [1] : vector<16x16xf32> to vector<16xf32>
    %50 = vector.shape_cast %49 : vector<16xf32> to vector<16x1xf32>
    %51 = vector.broadcast %50 : vector<16x1xf32> to vector<16x16xf32>
    %52 = arith.subf %48, %51 : vector<16x16xf32>
    %53 = math.exp %52 : vector<16x16xf32>
    %cst_18 = arith.constant dense<0.000000e+00> : vector<16xf32>
    %54 = vector.multi_reduction <add>, %53, %cst_18 [1] : vector<16x16xf32> to vector<16xf32>
    %55 = vector.shape_cast %54 : vector<16xf32> to vector<16x1xf32>
    %56 = tpu.reciprocal %55 {approx = true} : vector<16x1xf32> -> vector<16x1xf32>
    %57 = vector.broadcast %56 : vector<16x1xf32> to vector<16x16xf32>
    %58 = arith.mulf %53, %57 : vector<16x16xf32>
    %59 = arith.truncf %58 : vector<16x16xf32> to vector<16x16xbf16>
    %60 = vector.extract_strided_slice %43 {offsets = [0, 0], sizes = [16, 8], strides = [1, 1]} : vector<16x32xbf16> to vector<16x8xbf16>
    %cst_19 = arith.constant dense<0.000000e+00> : vector<16x8xf32>
    %61 = tpu.matmul %59, %60, %cst_19 {dimension_numbers = #tpu.dot_dimension_numbers<[1], [0], [0], [1], [0, 0, 1, 1], [], []>} : vector<16x16xbf16>, vector<16x8xbf16>, vector<16x8xf32> -> vector<16x8xf32>
    %62 = vector.extract_strided_slice %39 {offsets = [0, 8], sizes = [16, 8], strides = [1, 1]} : vector<16x32xbf16> to vector<16x8xbf16>
    %63 = vector.extract_strided_slice %41 {offsets = [0, 8], sizes = [16, 8], strides = [1, 1]} : vector<16x32xbf16> to vector<16x8xbf16>
    %cst_20 = arith.constant dense<0.000000e+00> : vector<16x16xf32>
    %64 = tpu.matmul %62, %63, %cst_20 {dimension_numbers = #tpu.dot_dimension_numbers<[1], [1], [0], [0], [0, 0, 1, 0], [], []>} : vector<16x8xbf16>, vector<16x8xbf16>, vector<16x16xf32> -> vector<16x16xf32>
    %65 = vector.broadcast %35 : vector<1x16xf32> to vector<16x16xf32>
    %66 = arith.addf %64, %65 : vector<16x16xf32>
    %cst_21 = arith.constant dense<0xFF800000> : vector<16xf32>
    %67 = vector.multi_reduction <maximumf>, %66, %cst_21 [1] : vector<16x16xf32> to vector<16xf32>
    %68 = vector.shape_cast %67 : vector<16xf32> to vector<16x1xf32>
    %69 = vector.broadcast %68 : vector<16x1xf32> to vector<16x16xf32>
    %70 = arith.subf %66, %69 : vector<16x16xf32>
    %71 = math.exp %70 : vector<16x16xf32>
    %cst_22 = arith.constant dense<0.000000e+00> : vector<16xf32>
    %72 = vector.multi_reduction <add>, %71, %cst_22 [1] : vector<16x16xf32> to vector<16xf32>
    %73 = vector.shape_cast %72 : vector<16xf32> to vector<16x1xf32>
    %74 = tpu.reciprocal %73 {approx = true} : vector<16x1xf32> -> vector<16x1xf32>
    %75 = vector.broadcast %74 : vector<16x1xf32> to vector<16x16xf32>
    %76 = arith.mulf %71, %75 : vector<16x16xf32>
    %77 = arith.truncf %76 : vector<16x16xf32> to vector<16x16xbf16>
    %78 = vector.extract_strided_slice %43 {offsets = [0, 8], sizes = [16, 8], strides = [1, 1]} : vector<16x32xbf16> to vector<16x8xbf16>
    %cst_23 = arith.constant dense<0.000000e+00> : vector<16x8xf32>
    %79 = tpu.matmul %77, %78, %cst_23 {dimension_numbers = #tpu.dot_dimension_numbers<[1], [0], [0], [1], [0, 0, 1, 1], [], []>} : vector<16x16xbf16>, vector<16x8xbf16>, vector<16x8xf32> -> vector<16x8xf32>
    %80 = vector.extract_strided_slice %39 {offsets = [0, 16], sizes = [16, 8], strides = [1, 1]} : vector<16x32xbf16> to vector<16x8xbf16>
    %81 = vector.extract_strided_slice %41 {offsets = [0, 16], sizes = [16, 8], strides = [1, 1]} : vector<16x32xbf16> to vector<16x8xbf16>
    %cst_24 = arith.constant dense<0.000000e+00> : vector<16x16xf32>
    %82 = tpu.matmul %80, %81, %cst_24 {dimension_numbers = #tpu.dot_dimension_numbers<[1], [1], [0], [0], [0, 0, 1, 0], [], []>} : vector<16x8xbf16>, vector<16x8xbf16>, vector<16x16xf32> -> vector<16x16xf32>
    %83 = vector.broadcast %35 : vector<1x16xf32> to vector<16x16xf32>
    %84 = arith.addf %82, %83 : vector<16x16xf32>
    %cst_25 = arith.constant dense<0xFF800000> : vector<16xf32>
    %85 = vector.multi_reduction <maximumf>, %84, %cst_25 [1] : vector<16x16xf32> to vector<16xf32>
    %86 = vector.shape_cast %85 : vector<16xf32> to vector<16x1xf32>
    %87 = vector.broadcast %86 : vector<16x1xf32> to vector<16x16xf32>
    %88 = arith.subf %84, %87 : vector<16x16xf32>
    %89 = math.exp %88 : vector<16x16xf32>
    %cst_26 = arith.constant dense<0.000000e+00> : vector<16xf32>
    %90 = vector.multi_reduction <add>, %89, %cst_26 [1] : vector<16x16xf32> to vector<16xf32>
    %91 = vector.shape_cast %90 : vector<16xf32> to vector<16x1xf32>
    %92 = tpu.reciprocal %91 {approx = true} : vector<16x1xf32> -> vector<16x1xf32>
    %93 = vector.broadcast %92 : vector<16x1xf32> to vector<16x16xf32>
    %94 = arith.mulf %89, %93 : vector<16x16xf32>
    %95 = arith.truncf %94 : vector<16x16xf32> to vector<16x16xbf16>
    %96 = vector.extract_strided_slice %43 {offsets = [0, 16], sizes = [16, 8], strides = [1, 1]} : vector<16x32xbf16> to vector<16x8xbf16>
    %cst_27 = arith.constant dense<0.000000e+00> : vector<16x8xf32>
    %97 = tpu.matmul %95, %96, %cst_27 {dimension_numbers = #tpu.dot_dimension_numbers<[1], [0], [0], [1], [0, 0, 1, 1], [], []>} : vector<16x16xbf16>, vector<16x8xbf16>, vector<16x8xf32> -> vector<16x8xf32>
    %98 = vector.extract_strided_slice %39 {offsets = [0, 24], sizes = [16, 8], strides = [1, 1]} : vector<16x32xbf16> to vector<16x8xbf16>
    %99 = vector.extract_strided_slice %41 {offsets = [0, 24], sizes = [16, 8], strides = [1, 1]} : vector<16x32xbf16> to vector<16x8xbf16>
    %cst_28 = arith.constant dense<0.000000e+00> : vector<16x16xf32>
    %100 = tpu.matmul %98, %99, %cst_28 {dimension_numbers = #tpu.dot_dimension_numbers<[1], [1], [0], [0], [0, 0, 1, 0], [], []>} : vector<16x8xbf16>, vector<16x8xbf16>, vector<16x16xf32> -> vector<16x16xf32>
    %101 = vector.broadcast %35 : vector<1x16xf32> to vector<16x16xf32>
    %102 = arith.addf %100, %101 : vector<16x16xf32>
    %cst_29 = arith.constant dense<0xFF800000> : vector<16xf32>
    %103 = vector.multi_reduction <maximumf>, %102, %cst_29 [1] : vector<16x16xf32> to vector<16xf32>
    %104 = vector.shape_cast %103 : vector<16xf32> to vector<16x1xf32>
    %105 = vector.broadcast %104 : vector<16x1xf32> to vector<16x16xf32>
    %106 = arith.subf %102, %105 : vector<16x16xf32>
    %107 = math.exp %106 : vector<16x16xf32>
    %cst_30 = arith.constant dense<0.000000e+00> : vector<16xf32>
    %108 = vector.multi_reduction <add>, %107, %cst_30 [1] : vector<16x16xf32> to vector<16xf32>
    %109 = vector.shape_cast %108 : vector<16xf32> to vector<16x1xf32>
    %110 = tpu.reciprocal %109 {approx = true} : vector<16x1xf32> -> vector<16x1xf32>
    %111 = vector.broadcast %110 : vector<16x1xf32> to vector<16x16xf32>
    %112 = arith.mulf %107, %111 : vector<16x16xf32>
    %113 = arith.truncf %112 : vector<16x16xf32> to vector<16x16xbf16>
    %114 = vector.extract_strided_slice %43 {offsets = [0, 24], sizes = [16, 8], strides = [1, 1]} : vector<16x32xbf16> to vector<16x8xbf16>
    %cst_31 = arith.constant dense<0.000000e+00> : vector<16x8xf32>
    %115 = tpu.matmul %113, %114, %cst_31 {dimension_numbers = #tpu.dot_dimension_numbers<[1], [0], [0], [1], [0, 0, 1, 1], [], []>} : vector<16x16xbf16>, vector<16x8xbf16>, vector<16x8xf32> -> vector<16x8xf32>
    %116 = tpu.concatenate %61, %79, %97, %115 in 1 : vector<16x8xf32>, vector<16x8xf32>, vector<16x8xf32>, vector<16x8xf32> -> vector<16x32xf32>
    %117 = arith.truncf %116 : vector<16x32xf32> to vector<16x32xbf16>
    %118 = arith.index_cast %37 : i32 to index
    %c0_32 = arith.constant 0 : index
    %119 = vector.load %arg8[%118, %c0_32] : memref<16x32xbf16, #tpu.memory_space<vmem>>, vector<16x32xbf16>
    tpu.vector_store %arg8[%118, %c0_32], %117 {strides = array<i32>} : memref<16x32xbf16, #tpu.memory_space<vmem>>, vector<16x32xbf16>,
    %c1_i32 = arith.constant 1 : i32
    %c0_33 = arith.constant 0 : index
    %c0_34 = arith.constant 0 : index
    %120 = vector.load %arg8[%c0_33, %c0_34] : memref<16x32xbf16, #tpu.memory_space<vmem>>, vector<16x32xbf16>
    %c0_35 = arith.constant 0 : index
    %c0_36 = arith.constant 0 : index
    %121 = vector.load %arg4[%c0_35, %c0_36] : memref<32x32xbf16, #tpu.memory_space<vmem>>, vector<32x32xbf16>
    %cst_37 = arith.constant dense<0.000000e+00> : vector<16x32xf32>
    %122 = tpu.matmul %120, %121, %cst_37 {dimension_numbers = #tpu.dot_dimension_numbers<[1], [0], [0], [1], [0, 0, 1, 1], [], []>} : vector<16x32xbf16>, vector<32x32xbf16>, vector<16x32xf32> -> vector<16x32xf32>
    %c0_38 = arith.constant 0 : index
    %c0_39 = arith.constant 0 : index
    %123 = vector.load %arg5[%c0_38, %c0_39] : memref<1x32xf32, #tpu.memory_space<vmem>>, vector<1x32xf32>
    %124 = vector.shape_cast %123 : vector<1x32xf32> to vector<32xf32>
    %125 = vector.shape_cast %124 : vector<32xf32> to vector<1x32xf32>
    %126 = vector.broadcast %125 : vector<1x32xf32> to vector<16x32xf32>
    %127 = arith.addf %122, %126 : vector<16x32xf32>
    %128 = vector.shape_cast %127 : vector<16x32xf32> to vector<1x16x32xf32>
    %c0_40 = arith.constant 0 : index
    %c0_41 = arith.constant 0 : index
    %c0_42 = arith.constant 0 : index
    %129 = vector.load %arg6[%c0_40, %c0_41, %c0_42] : memref<1x16x32xf32, #tpu.memory_space<vmem>>, vector<1x16x32xf32>
    tpu.vector_store %arg6[%c0_40, %c0_41, %c0_42], %128 {strides = array<i32>} : memref<1x16x32xf32, #tpu.memory_space<vmem>>, vector<1x16x32xf32>,
    return
  }
  func.func @transform_0(%arg0: i32) -> (i32, i32, i32) {
    %c0_i32 = arith.constant 0 : i32
    %c0_i32_0 = arith.constant 0 : i32
    %c0_i32_1 = arith.constant 0 : i32
    return %arg0, %c0_i32, %c0_i32_0 : i32, i32, i32
  }
  func.func @transform_1(%arg0: i32) -> (i32, i32) {
    %c0_i32 = arith.constant 0 : i32
    %c0_i32_0 = arith.constant 0 : i32
    %c0_i32_1 = arith.constant 0 : i32
    return %c0_i32, %c0_i32_0 : i32, i32
  }
  func.func @transform_2(%arg0: i32) -> (i32, i32) {
    %c0_i32 = arith.constant 0 : i32
    %c0_i32_0 = arith.constant 0 : i32
    %c0_i32_1 = arith.constant 0 : i32
    return %c0_i32, %c0_i32_0 : i32, i32
  }
  func.func @transform_3(%arg0: i32) -> (i32, i32) {
    %c0_i32 = arith.constant 0 : i32
    %c0_i32_0 = arith.constant 0 : i32
    %c0_i32_1 = arith.constant 0 : i32
    return %c0_i32, %c0_i32_0 : i32, i32
  }
  func.func @transform_4(%arg0: i32) -> (i32, i32) {
    %c0_i32 = arith.constant 0 : i32
    %c0_i32_0 = arith.constant 0 : i32
    %c0_i32_1 = arith.constant 0 : i32
    return %c0_i32, %c0_i32_0 : i32, i32
  }
  func.func @transform_5(%arg0: i32) -> (i32, i32, i32) {
    %c0_i32 = arith.constant 0 : i32
    %c0_i32_0 = arith.constant 0 : i32
    %c0_i32_1 = arith.constant 0 : i32
    return %arg0, %c0_i32, %c0_i32_0 : i32, i32, i32
  }
}

</mosaic_0001>

<llo_original>
// kernel: tpu_custom_call.1
$region0: #{tpu_custom_call.1}
  #allocation0 [shape = 'u32[]', space=smem, size = 0x4, offset = 0x4, fixed_abs, tag = 'smem constant byte address 0x4 - core index']
  #allocation1 [shape = 'u32[72,128]{1,0:T(1,128)}', space=vmem, size = 0x9000, scoped, tag = 'internal scratch']
  #allocation2 [shape = 'bf16[16,96]{1,0:T(8,128)(2,1)}', space=vmem, size = 0x1000, scoped, tag = 'scratch operand']
  #allocation3 [shape = 'bf16[16,32]{1,0:T(8,128)(2,1)}', space=vmem, size = 0x1000, scoped, tag = 'scratch operand']
  %s0 = inlined_call_operand.hbm [shape: f32[4,16,32], index: 0, kind: input, shape index: {}]
  %s1 = inlined_call_operand.hbm [shape: bf16[32,96], index: 1, kind: input, shape index: {}]
  %s2 = inlined_call_operand.vmem [shape: f32[1,96], index: 2, kind: input, shape index: {}]
  %s3 = inlined_call_operand.hbm [shape: bf16[32,32], index: 3, kind: input, shape index: {}]
  %s4 = inlined_call_operand.vmem [shape: f32[1,32], index: 4, kind: input, shape index: {}]
  %s5 = inlined_call_operand.hbm [shape: f32[4,16,32], index: 5, kind: output, shape index: {}]
  %s6 = sld [smem:[#allocation0]]
  $region65: #{tpu_custom_call.1} parent=0
    _
  %s8 = ssub.s32 1, %s6
  %s9 = scalar_select 0, %s8, %s6
  $region1: #{tpu_custom_call.1} parent=0
    #allocation4 [shape = 'u8[16384]{0}', space=vmem, size = 0x4000, scoped, tag = 'input window, operand 0']
    #allocation5 [shape = 's32[2]{0}', space=sflag, size = 0x8, scoped, tag = 'scoped memory for tpu_custom_call.1']
    #allocation6 [shape = 's32[2]{0}', space=sflag, size = 0x8, scoped, tag = 'scoped memory for tpu_custom_call.1']
    #allocation7 [shape = 'u8[8192]{0}', space=vmem, size = 0x2000, scoped, tag = 'input window, operand 1, single buffered']
    #allocation8 [shape = 's32[1]{0}', space=sflag, size = 0x4, scoped, tag = 'scoped memory for tpu_custom_call.1']
    #allocation9 [shape = 'u8[8192]{0}', space=vmem, size = 0x2000, scoped, tag = 'input window, operand 3, single buffered']
    #allocation10 [shape = 'u8[16384]{0}', space=vmem, size = 0x4000, scoped, tag = 'output window, operand 0']
    %10 = vsyncpa [#allocation5], 0
    %s11 = scalar_lea.sflag [#allocation5], 1
    %12 = vsyncpa %s11, 0
    %13 = vsyncpa [#allocation8], 0
    %14 = vsyncpa [#allocation6], 0
    %s15 = scalar_lea.sflag [#allocation6], 1
    %16 = vsyncpa %s15, 0
    loop: start=0, step=1, limit=6
    $region2: #{tpu_custom_call.1} parent=1 // loop_pre_header
      _
    $region3: #{tpu_custom_call.1} parent=1 // loop_header
      %s18 = sphi 0, %s22
      %p19 = scmp.ge.s32.totalorder %s18, 6
      %s28 = sphi 0, %s30
      %s31 = sphi 0, %s28
      %s32 = sphi 0, %s31
      %s48 = sphi 0, %s32
      %s52 = sphi 0, %s52
      %s54 = sphi 0, %s52
      %s55 = sphi 0, %s54
      %s69 = sphi 0, %s55
      %s73 = sphi 0, %s73
      %s75 = sphi 0, %s73
      %s76 = sphi 0, %s75
      %s90 = sphi 0, %s76
      %s94 = sphi 0, %s94
      %s96 = sphi 0, %s94
      %s97 = sphi 0, %s96
      %s111 = sphi 0, %s97
      %s115 = sphi 0, %s115
      %s117 = sphi 0, %s115
      %s118 = sphi 0, %s117
      %s132 = sphi 0, %s118
      %s138 = sphi 0, %s140
      %s141 = sphi 0, %s138
      %s142 = sphi 0, %s141
      %s158 = sphi 0, %s142
    $region4: #{tpu_custom_call.1} parent=1 // loop_header_branch
      %21 = sbr.rel (%p19) target = $region8
    $region5: #{tpu_custom_call.1} parent=1 // loop_body
      %s23 = ssub.s32 %s18, 1
      %s24 = ssub.s32 %s18, 2
      %s25 = sadd.s32 %s18, 1
      %s26 = ssub.s32 %s18, %s25
      %p27 = scmp.eq.s32.totalorder %s26, 0
      %s29 = sadd.s32 %s28, 1
      %s30 = scalar_select %p27, %s28, %s29
      %p33 = pneg %p27
      %p34 = scmp.eq.s32.totalorder %s18, 3
      %p35 = por %p33, %p34
      %p36 = scmp.ne.s32.totalorder %s28, %s31
      %p37 = scmp.eq.s32.totalorder %s18, 0
      %p38 = por %p36, %p37
      %p39 = scmp.ne.s32.totalorder %s28, %s31
      %p40 = scmp.eq.s32.totalorder %s23, 3
      %p41 = por %p39, %p40
      %p42 = scmp.ne.s32.totalorder %s31, %s32
      %p43 = scmp.eq.s32.totalorder %s23, 0
      %p44 = por %p42, %p43
      %p45 = scmp.ne.s32.totalorder %s31, %s32
      %p46 = scmp.eq.s32.totalorder %s24, 3
      %p47 = por %p45, %p46
      %p49 = scmp.ne.s32.totalorder %s32, %s48
      %p50 = scmp.eq.s32.totalorder %s24, 0
      %p51 = por %p49, %p50
      %s53 = sadd.s32 %s52, 1
      %p56 = scmp.eq.s32.totalorder %s18, 3
      %p57 = scmp.ne.s32.totalorder %s52, %s54
      %p58 = scmp.eq.s32.totalorder %s18, 0
      %p59 = por %p57, %p58
      %p60 = scmp.ne.s32.totalorder %s52, %s54
      %p61 = scmp.eq.s32.totalorder %s23, 3
      %p62 = por %p60, %p61
      %p63 = scmp.ne.s32.totalorder %s54, %s55
      %p64 = scmp.eq.s32.totalorder %s23, 0
      %p65 = por %p63, %p64
      %p66 = scmp.ne.s32.totalorder %s54, %s55
      %p67 = scmp.eq.s32.totalorder %s24, 3
      %p68 = por %p66, %p67
      %p70 = scmp.ne.s32.totalorder %s55, %s69
      %p71 = scmp.eq.s32.totalorder %s24, 0
      %p72 = por %p70, %p71
      %s74 = sadd.s32 %s73, 1
      %p77 = scmp.eq.s32.totalorder %s18, 3
      %p78 = scmp.ne.s32.totalorder %s73, %s75
      %p79 = scmp.eq.s32.totalorder %s18, 0
      %p80 = por %p78, %p79
      %p81 = scmp.ne.s32.totalorder %s73, %s75
      %p82 = scmp.eq.s32.totalorder %s23, 3
      %p83 = por %p81, %p82
      %p84 = scmp.ne.s32.totalorder %s75, %s76
      %p85 = scmp.eq.s32.totalorder %s23, 0
      %p86 = por %p84, %p85
      %p87 = scmp.ne.s32.totalorder %s75, %s76
      %p88 = scmp.eq.s32.totalorder %s24, 3
      %p89 = por %p87, %p88
      %p91 = scmp.ne.s32.totalorder %s76, %s90
      %p92 = scmp.eq.s32.totalorder %s24, 0
      %p93 = por %p91, %p92
      %s95 = sadd.s32 %s94, 1
      %p98 = scmp.eq.s32.totalorder %s18, 3
      %p99 = scmp.ne.s32.totalorder %s94, %s96
      %p100 = scmp.eq.s32.totalorder %s18, 0
      %p101 = por %p99, %p100
      %p102 = scmp.ne.s32.totalorder %s94, %s96
      %p103 = scmp.eq.s32.totalorder %s23, 3
      %p104 = por %p102, %p103
      %p105 = scmp.ne.s32.totalorder %s96, %s97
      %p106 = scmp.eq.s32.totalorder %s23, 0
      %p107 = por %p105, %p106
      %p108 = scmp.ne.s32.totalorder %s96, %s97
      %p109 = scmp.eq.s32.totalorder %s24, 3
      %p110 = por %p108, %p109
      %p112 = scmp.ne.s32.totalorder %s97, %s111
      %p113 = scmp.eq.s32.totalorder %s24, 0
      %p114 = por %p112, %p113
      %s116 = sadd.s32 %s115, 1
      %p119 = scmp.eq.s32.totalorder %s18, 3
      %p120 = scmp.ne.s32.totalorder %s115, %s117
      %p121 = scmp.eq.s32.totalorder %s18, 0
      %p122 = por %p120, %p121
      %p123 = scmp.ne.s32.totalorder %s115, %s117
      %p124 = scmp.eq.s32.totalorder %s23, 3
      %p125 = por %p123, %p124
      %p126 = scmp.ne.s32.totalorder %s117, %s118
      %p127 = scmp.eq.s32.totalorder %s23, 0
      %p128 = por %p126, %p127
      %p129 = scmp.ne.s32.totalorder %s117, %s118
      %p130 = scmp.eq.s32.totalorder %s24, 3
      %p131 = por %p129, %p130
      %p133 = scmp.ne.s32.totalorder %s118, %s132
      %p134 = scmp.eq.s32.totalorder %s24, 0
      %p135 = por %p133, %p134
      %s136 = ssub.s32 %s18, %s25
      %p137 = scmp.eq.s32.totalorder %s136, 0
      %s139 = sadd.s32 %s138, 1
      %s140 = scalar_select %p137, %s138, %s139
      %p143 = pneg %p137
      %p144 = scmp.eq.s32.totalorder %s18, 3
      %p145 = por %p143, %p144
      %p146 = scmp.ne.s32.totalorder %s138, %s141
      %p147 = scmp.eq.s32.totalorder %s18, 0
      %p148 = por %p146, %p147
      %p149 = scmp.ne.s32.totalorder %s138, %s141
      %p150 = scmp.eq.s32.totalorder %s23, 3
      %p151 = por %p149, %p150
      %p152 = scmp.ne.s32.totalorder %s141, %s142
      %p153 = scmp.eq.s32.totalorder %s23, 0
      %p154 = por %p152, %p153
      %p155 = scmp.ne.s32.totalorder %s141, %s142
      %p156 = scmp.eq.s32.totalorder %s24, 3
      %p157 = por %p155, %p156
      %p159 = scmp.ne.s32.totalorder %s142, %s158
      %p160 = scmp.eq.s32.totalorder %s24, 0
      %p161 = por %p159, %p160
      %p162 = scmp.le.s32.totalorder 1, %s18
      %p163 = scmp.lt.s32.totalorder %s18, 5
      %p164 = pnand %p162, %p163
      %p165 = pneg %p164
      // Predicated region
      $region9: #{tpu_custom_call.1} parent=5 // pred_check
        _
      $region10: #{tpu_custom_call.1} parent=5 // pred_check_branch
        %167 = sbr.rel (%p164) target = $region12
      $region11: #{tpu_custom_call.1} parent=5 // pred_region
        %s168 = ssub.s32 %s18, 1
        // Predicated region
        $region13: #{tpu_custom_call.1} parent=11 // pred_check
          %p169 = pneg %p65
        $region14: #{tpu_custom_call.1} parent=11 // pred_check_branch
          %171 = sbr.rel (%p169) target = $region16
        $region15: #{tpu_custom_call.1} parent=11 // pred_region
          %173 = vsyncadd [#allocation8], 0
          %s174 = sshll.u32 %s1, 4
          %s175 = int_to_ptr.hbm [resolvable:$true] %s174
          %s176 = sshll.u32 [#allocation7], 4
          %s177 = int_to_ptr.vmem [resolvable:$true] %s176
          %182 = dma.hbm_to_vmem [thread:$0]  %s175, 256, %s177, [#allocation8], 64, 64, 4
        $region16: #{tpu_custom_call.1} parent=11 // pred_fallthru
          _
        // Predicated region
        $region17: #{tpu_custom_call.1} parent=11 // pred_check
          %p183 = pneg %p86
        $region18: #{tpu_custom_call.1} parent=11 // pred_check_branch
          %185 = sbr.rel (%p183) target = $region20
        $region19: #{tpu_custom_call.1} parent=11 // pred_region
          _
        $region20: #{tpu_custom_call.1} parent=11 // pred_fallthru
          _
        // Predicated region
        $region21: #{tpu_custom_call.1} parent=11 // pred_check
          %p186 = pneg %p107
        $region22: #{tpu_custom_call.1} parent=11 // pred_check_branch
          %188 = sbr.rel (%p186) target = $region24
        $region23: #{tpu_custom_call.1} parent=11 // pred_region
          %190 = vsyncadd [#allocation8], 0
          %s191 = sshll.u32 %s3, 4
          %s192 = int_to_ptr.hbm [resolvable:$true] %s191
          %s193 = sshll.u32 [#allocation9], 4
          %s194 = int_to_ptr.vmem [resolvable:$true] %s193
          %199 = dma.hbm_to_vmem [thread:$0]  %s192, 256, %s194, [#allocation8], 64, 64, 4
        $region24: #{tpu_custom_call.1} parent=11 // pred_fallthru
          _
        // Predicated region
        $region25: #{tpu_custom_call.1} parent=11 // pred_check
          %p200 = pneg %p128
        $region26: #{tpu_custom_call.1} parent=11 // pred_check_branch
          %202 = sbr.rel (%p200) target = $region28
        $region27: #{tpu_custom_call.1} parent=11 // pred_region
          _
        $region28: #{tpu_custom_call.1} parent=11 // pred_fallthru
          _
      $region12: #{tpu_custom_call.1} parent=5 // pred_fallthru
        _
      %p203 = scmp.lt.s32.totalorder %s18, 4
      // Predicated region
      $region29: #{tpu_custom_call.1} parent=5 // pred_check
        %p204 = pneg %p203
      $region30: #{tpu_custom_call.1} parent=5 // pred_check_branch
        %206 = sbr.rel (%p204) target = $region32
      $region31: #{tpu_custom_call.1} parent=5 // pred_region
        // Predicated region
        $region33: #{tpu_custom_call.1} parent=31 // pred_check
          %p207 = pneg %p38
        $region34: #{tpu_custom_call.1} parent=31 // pred_check_branch
          %209 = sbr.rel (%p207) target = $region36
        $region35: #{tpu_custom_call.1} parent=31 // pred_region
          %s210 = sand.u32 %s28, 1
          %s211 = scalar_lea.sflag [#allocation5], %s210
          %s212 = sand.u32 %s28, 1
          %s213 = smul.addr %s212, 16
          %s214 = scalar_lea.vmem [#allocation4], %s213
          %216 = vsyncadd %s211, 0
          %s217 = smul.addr %s18, 2
          %s218 = smul.addr %s217, 8
          %s219 = scalar_lea.hbm %s0, %s218
          %s220 = sshll.u32 %s219, 4
          %s221 = int_to_ptr.hbm [resolvable:$true] %s220
          %s222 = sshll.u32 %s214, 4
          %s223 = int_to_ptr.vmem [resolvable:$true] %s222
          %228 = dma.hbm_to_vmem [thread:$0]  %s221, 256, %s223, %s211, 128, 128, 8
        $region36: #{tpu_custom_call.1} parent=31 // pred_fallthru
          _
      $region32: #{tpu_custom_call.1} parent=5 // pred_fallthru
        _
      %p229 = scmp.le.s32.totalorder 1, %s18
      %p230 = scmp.lt.s32.totalorder %s18, 5
      %p231 = pnand %p229, %p230
      %p232 = pneg %p231
      // Predicated region
      $region37: #{tpu_custom_call.1} parent=5 // pred_check
        _
      $region38: #{tpu_custom_call.1} parent=5 // pred_check_branch
        %234 = sbr.rel (%p231) target = $region40
      $region39: #{tpu_custom_call.1} parent=5 // pred_region
        %s235 = ssub.s32 %s18, 1
        %s236 = sand.u32 %s31, 1
        %s237 = scalar_lea.sflag [#allocation5], %s236
        %s238 = sand.u32 %s31, 1
        %s239 = smul.addr %s238, 16
        %s240 = scalar_lea.vmem [#allocation4], %s239
        // Predicated region
        $region41: #{tpu_custom_call.1} parent=39 // pred_check
          %p241 = pneg %p44
        $region42: #{tpu_custom_call.1} parent=39 // pred_check_branch
          %243 = sbr.rel (%p241) target = $region44
        $region43: #{tpu_custom_call.1} parent=39 // pred_region
          %245 = dma.done %s237, 256
        $region44: #{tpu_custom_call.1} parent=39 // pred_fallthru
          _
        // Predicated region
        $region45: #{tpu_custom_call.1} parent=39 // pred_check
          %p246 = pneg %p65
        $region46: #{tpu_custom_call.1} parent=39 // pred_check_branch
          %248 = sbr.rel (%p246) target = $region48
        $region47: #{tpu_custom_call.1} parent=39 // pred_region
          %250 = dma.done [#allocation8], 256
        $region48: #{tpu_custom_call.1} parent=39 // pred_fallthru
          _
        // Predicated region
        $region49: #{tpu_custom_call.1} parent=39 // pred_check
          %p251 = pneg %p107
        $region50: #{tpu_custom_call.1} parent=39 // pred_check_branch
          %253 = sbr.rel (%p251) target = $region52
        $region51: #{tpu_custom_call.1} parent=39 // pred_region
          %255 = dma.done [#allocation8], 256
        $region52: #{tpu_custom_call.1} parent=39 // pred_fallthru
          _
        %s256 = sand.u32 %s31, 1
        %s257 = scalar_lea.sflag [#allocation5], %s256
        %s258 = sand.u32 %s31, 1
        %s259 = smul.addr %s258, 16
        %s260 = scalar_lea.vmem [#allocation4], %s259
        %p261 = pneg %p44
        %p262 = pneg %p41
        %p263 = pneg %p65
        %p264 = pneg %p62
        %p265 = pneg %p86
        %p266 = pneg %p83
        %p267 = pneg %p107
        %p268 = pneg %p104
        %p269 = pneg %p128
        %p270 = pneg %p125
        %p271 = pneg %p154
        %p272 = pneg %p151
        %s273 = sand.u32 %s141, 1
        %s274 = scalar_lea.sflag [#allocation6], %s273
        %s275 = sand.u32 %s141, 1
        %s276 = smul.addr %s275, 16
        %s277 = scalar_lea.vmem [#allocation10], %s276
        %v279 = vld [vmem:[%s240] sm:$0xff]
        %v280 = vld [vmem:[%s240 + $0x8] sm:$0xff]
        %vm281 = vcmask 261120
        %v282 = vsel %vm281, %v279, 0.0
        %283 = vadd.xlane.f32.xlu0 %v282
        %v284 = vpop.xlane.xlu0 %283
        %v285 = vsel %vm281, %v280, 0.0
        %286 = vadd.xlane.f32.xlu0 %v285
        %v287 = vpop.xlane.xlu0 %286
        %v288 = vrcp.pop 32.0
        %v289 = vmul.f32 32.0, %v288
        %v290 = vsub.f32 1.0, %v289
        %v291 = vmul.f32 %v288, %v290
        %v292 = vadd.f32 %v288, %v291
        %vm293 = vweird.f32 %v288
        %v294 = vsel %vm293, %v288, %v292
        %v295 = vmul.f32 %v284, %v294
        %v296 = vmul.f32 %v287, %v294
        %v297 = vsub.f32 %v279, %v295
        %v298 = vsub.f32 %v280, %v296
        %v299 = vmul.f32 %v297, %v297
        %v300 = vmul.f32 %v298, %v298
        %v301 = vsel %vm281, %v299, 0.0
        %302 = vadd.xlane.f32.xlu0 %v301
        %v303 = vpop.xlane.xlu0 %302
        %v304 = vsel %vm281, %v300, 0.0
        %305 = vadd.xlane.f32.xlu0 %v304
        %v306 = vpop.xlane.xlu0 %305
        %v307 = vmul.f32 %v303, %v294
        %v308 = vmul.f32 %v306, %v294
        %v309 = vadd.f32 %v307, 1e-05
        %v310 = vadd.f32 %v308, 1e-05
        %v311 = vrsqrt.pop %v309
        %v312 = vmul.f32 %v311, %v309
        %v313 = vmul.f32 %v312, %v311
        %v314 = vmul.f32 0.5, %v313
        %v315 = vsub.f32 1.5, %v314
        %v316 = vmul.f32 %v311, %v315
        %vm317 = vweird.f32 %v309
        %vm318 = vweird.f32 %v311
        %vm319 = vmor %vm317, %vm318
        %v320 = vsel %vm319, %v311, %v316
        %v321 = vrsqrt.pop %v310
        %v322 = vmul.f32 %v321, %v310
        %v323 = vmul.f32 %v322, %v321
        %v324 = vmul.f32 0.5, %v323
        %v325 = vsub.f32 1.5, %v324
        %v326 = vmul.f32 %v321, %v325
        %vm327 = vweird.f32 %v310
        %vm328 = vweird.f32 %v321
        %vm329 = vmor %vm327, %vm328
        %v330 = vsel %vm329, %v321, %v326
        %v331 = vmul.f32 %v297, %v320
        %v332 = vmul.f32 %v298, %v330
        %v333 = vpack.c.bf16 %v332, %v331
        %v334 = vld [vmem:[#allocation7] sm:$0xf]
        %v335 = vld [vmem:[#allocation7 + $0x4] sm:$0xf]
        %v336 = vld [vmem:[#allocation7 + $0x8] sm:$0xf]
        %v337 = vld [vmem:[#allocation7 + $0xc] sm:$0xf]
        %v338 = vld [vmem:[%s2] sm:$0x1]
        %v340 = vperm.slane %v338, 0
        %v346 = vunpack.c.l.b16 %v334
        %v347 = vunpack.c.l.b16 %v335
        %v348 = vunpack.c.l.b16 %v336
        %v349 = vunpack.c.l.b16 %v337
        %v350 = vpack.c.b16 %v347, %v346
        %v351 = vpack.c.b16 %v349, %v348
        %v355 = vsel %vm281, %v333, 0
        %357 = vmatpush.bf16.msra.mxu0 0
        %358 = vmatpush.bf16.msra.mxu0 0
        %359 = vmatpush.bf16.msra.mxu0 0
        %360 = vmatpush.bf16.msra.mxu0 0
        %361 = vmatpush.bf16.msra.mxu0 0
        %362 = vmatpush.bf16.msra.mxu0 0
        %363 = vmatpush.bf16.msra.mxu0 %v351
        %364 = vmatpush.bf16.msra.mxu0 %v350
        %365 = vmatmul.bf16.gmra.mxu0 %v355
        %v366 = vpop.f32.mrf.mxu0
        %v367 = vadd.f32 %v340, %v366
        %v368 = vpop.f32.mrf.mxu0
        %v369 = vadd.f32 %v340, %v368
        %370 = vdwg.mxu0
        %v371 = vpack.c.bf16 %v367, %v367
        %v372 = vpack.c.bf16 %v369, %v369
        %vm373 = vcmask 781312
        %374 = vst.msk [vmem:[#allocation2] sm:$0xf] %vm373, %v371
        %375 = vst.msk [vmem:[#allocation2 + $0x4] sm:$0xf] %vm373, %v372
        %v376 = vlaneseq
        %v377 = vand.u32 %v376, 127
        %vm378 = vcmp.lt.s32.totalorder %v377, 8
        %v379 = vsel %vm378, 0.0, -1e+30
        %v380 = vld [vmem:[#allocation2] sm:$0xf]
        %v381 = vld [vmem:[#allocation2 + $0x4] sm:$0xf]
        %v384 = vunpack.c.l.b16 %v380
        %v385 = vunpack.c.l.b16 %v381
        %v386 = vpack.c.b16 %v385, %v384
        %387 = vrot.lane.b32.xlu0 %v386, 96
        %v388 = vpop.permute.xlu0 %387
        %vm389 = vcmask 64512
        %v391 = vsel %vm389, %v386, 0
        %v394 = vsel %vm389, %v388, 0
        %396 = vmatpush.bf16.xpose.msra.mxu0 0
        %397 = vmatpush.bf16.xpose.msra.mxu0 0
        %398 = vmatpush.bf16.xpose.msra.mxu0 0
        %399 = vmatpush.bf16.xpose.msra.mxu0 0
        %400 = vmatpush.bf16.xpose.msra.mxu0 0
        %401 = vmatpush.bf16.xpose.msra.mxu0 0
        %402 = vmatpush.bf16.xpose.msra.mxu0 0
        %403 = vmatpush.bf16.xpose.msra.mxu0 %v394
        %404 = vmatmul.bf16.gmra.mxu0 %v391
        %v405 = vpop.f32.mrf.mxu0
        %v406 = vadd.f32 %v379, %v405
        %v407 = vpop.f32.mrf.mxu0
        %v408 = vadd.f32 %v379, %v407
        %409 = vdwg.mxu0
        %vm410 = vcmask 130048
        %v411 = vsel %vm410, %v406, -inf
        %412 = vmax.xlane.f32.xlu0 %v411
        %v413 = vpop.xlane.xlu0 %412
        %v414 = vsel %vm410, %v408, -inf
        %415 = vmax.xlane.f32.xlu0 %v414
        %v416 = vpop.xlane.xlu0 %415
        %v417 = vsub.f32 %v406, %v413
        %v418 = vsub.f32 %v408, %v416
        %v419 = vmul.f32 %v417, 1.442695
        %v420 = vpow.pop %v419
        %v421 = vmul.f32 %v418, 1.442695
        %v422 = vpow.pop %v421
        %v423 = vsel %vm410, %v420, 0.0
        %424 = vadd.xlane.f32.xlu0 %v423
        %v425 = vpop.xlane.xlu0 %424
        %v426 = vsel %vm410, %v422, 0.0
        %427 = vadd.xlane.f32.xlu0 %v426
        %v428 = vpop.xlane.xlu0 %427
        %v429 = vrcp.pop %v425
        %v430 = vrcp.pop %v428
        %v431 = vmul.f32 %v420, %v429
        %v432 = vmul.f32 %v422, %v430
        %v433 = vpack.c.bf16 %v432, %v431
        %434 = vrot.lane.b32.xlu0 %v386, 64
        %v435 = vpop.permute.xlu0 %434
        %v438 = vsel %vm410, %v433, 0
        %440 = vmatpush.bf16.msra.mxu0 0
        %441 = vmatpush.bf16.msra.mxu0 0
        %442 = vmatpush.bf16.msra.mxu0 0
        %443 = vmatpush.bf16.msra.mxu0 0
        %444 = vmatpush.bf16.msra.mxu0 0
        %445 = vmatpush.bf16.msra.mxu0 0
        %446 = vmatpush.bf16.msra.mxu0 0
        %447 = vmatpush.bf16.msra.mxu0 %v435
        %448 = vmatmul.bf16.gmra.mxu0 %v438
        %v449 = vpop.f32.mrf.mxu0
        %v450 = vadd.f32 0.0, %v449
        %v451 = vpop.f32.mrf.mxu0
        %v452 = vadd.f32 0.0, %v451
        %453 = vdwg.mxu0
        %454 = vrot.lane.b32.xlu0 %v386, 120
        %v455 = vpop.permute.xlu0 %454
        %456 = vrot.lane.b32.xlu0 %v386, 88
        %v457 = vpop.permute.xlu0 %456
        %v459 = vsel %vm389, %v455, 0
        %v462 = vsel %vm389, %v457, 0
        %464 = vmatpush.bf16.xpose.msra.mxu0 0
        %465 = vmatpush.bf16.xpose.msra.mxu0 0
        %466 = vmatpush.bf16.xpose.msra.mxu0 0
        %467 = vmatpush.bf16.xpose.msra.mxu0 0
        %468 = vmatpush.bf16.xpose.msra.mxu0 0
        %469 = vmatpush.bf16.xpose.msra.mxu0 0
        %470 = vmatpush.bf16.xpose.msra.mxu0 0
        %471 = vmatpush.bf16.xpose.msra.mxu0 %v462
        %472 = vmatmul.bf16.gmra.mxu0 %v459
        %v473 = vpop.f32.mrf.mxu0
        %v474 = vadd.f32 %v379, %v473
        %v475 = vpop.f32.mrf.mxu0
        %v476 = vadd.f32 %v379, %v475
        %477 = vdwg.mxu0
        %v478 = vsel %vm410, %v474, -inf
        %479 = vmax.xlane.f32.xlu0 %v478
        %v480 = vpop.xlane.xlu0 %479
        %v481 = vsel %vm410, %v476, -inf
        %482 = vmax.xlane.f32.xlu0 %v481
        %v483 = vpop.xlane.xlu0 %482
        %v484 = vsub.f32 %v474, %v480
        %v485 = vsub.f32 %v476, %v483
        %v486 = vmul.f32 %v484, 1.442695
        %v487 = vpow.pop %v486
        %v488 = vmul.f32 %v485, 1.442695
        %v489 = vpow.pop %v488
        %v490 = vsel %vm410, %v487, 0.0
        %491 = vadd.xlane.f32.xlu0 %v490
        %v492 = vpop.xlane.xlu0 %491
        %v493 = vsel %vm410, %v489, 0.0
        %494 = vadd.xlane.f32.xlu0 %v493
        %v495 = vpop.xlane.xlu0 %494
        %v496 = vrcp.pop %v492
        %v497 = vrcp.pop %v495
        %v498 = vmul.f32 %v487, %v496
        %v499 = vmul.f32 %v489, %v497
        %v500 = vpack.c.bf16 %v499, %v498
        %501 = vrot.lane.b32.xlu0 %v386, 56
        %v502 = vpop.permute.xlu0 %501
        %v505 = vsel %vm410, %v500, 0
        %507 = vmatpush.bf16.msra.mxu0 0
        %508 = vmatpush.bf16.msra.mxu0 0
        %509 = vmatpush.bf16.msra.mxu0 0
        %510 = vmatpush.bf16.msra.mxu0 0
        %511 = vmatpush.bf16.msra.mxu0 0
        %512 = vmatpush.bf16.msra.mxu0 0
        %513 = vmatpush.bf16.msra.mxu0 0
        %514 = vmatpush.bf16.msra.mxu0 %v502
        %515 = vmatmul.bf16.gmra.mxu0 %v505
        %v516 = vpop.f32.mrf.mxu0
        %v517 = vadd.f32 0.0, %v516
        %v518 = vpop.f32.mrf.mxu0
        %v519 = vadd.f32 0.0, %v518
        %520 = vdwg.mxu0
        %521 = vrot.lane.b32.xlu0 %v386, 112
        %v522 = vpop.permute.xlu0 %521
        %523 = vrot.lane.b32.xlu0 %v386, 80
        %v524 = vpop.permute.xlu0 %523
        %v526 = vsel %vm389, %v522, 0
        %v529 = vsel %vm389, %v524, 0
        %531 = vmatpush.bf16.xpose.msra.mxu0 0
        %532 = vmatpush.bf16.xpose.msra.mxu0 0
        %533 = vmatpush.bf16.xpose.msra.mxu0 0
        %534 = vmatpush.bf16.xpose.msra.mxu0 0
        %535 = vmatpush.bf16.xpose.msra.mxu0 0
        %536 = vmatpush.bf16.xpose.msra.mxu0 0
        %537 = vmatpush.bf16.xpose.msra.mxu0 0
        %538 = vmatpush.bf16.xpose.msra.mxu0 %v529
        %539 = vmatmul.bf16.gmra.mxu0 %v526
        %v540 = vpop.f32.mrf.mxu0
        %v541 = vadd.f32 %v379, %v540
        %v542 = vpop.f32.mrf.mxu0
        %v543 = vadd.f32 %v379, %v542
        %544 = vdwg.mxu0
        %v545 = vsel %vm410, %v541, -inf
        %546 = vmax.xlane.f32.xlu0 %v545
        %v547 = vpop.xlane.xlu0 %546
        %v548 = vsel %vm410, %v543, -inf
        %549 = vmax.xlane.f32.xlu0 %v548
        %v550 = vpop.xlane.xlu0 %549
        %v551 = vsub.f32 %v541, %v547
        %v552 = vsub.f32 %v543, %v550
        %v553 = vmul.f32 %v551, 1.442695
        %v554 = vpow.pop %v553
        %v555 = vmul.f32 %v552, 1.442695
        %v556 = vpow.pop %v555
        %v557 = vsel %vm410, %v554, 0.0
        %558 = vadd.xlane.f32.xlu0 %v557
        %v559 = vpop.xlane.xlu0 %558
        %v560 = vsel %vm410, %v556, 0.0
        %561 = vadd.xlane.f32.xlu0 %v560
        %v562 = vpop.xlane.xlu0 %561
        %v563 = vrcp.pop %v559
        %v564 = vrcp.pop %v562
        %v565 = vmul.f32 %v554, %v563
        %v566 = vmul.f32 %v556, %v564
        %v567 = vpack.c.bf16 %v566, %v565
        %568 = vrot.lane.b32.xlu0 %v386, 48
        %v569 = vpop.permute.xlu0 %568
        %v572 = vsel %vm410, %v567, 0
        %574 = vmatpush.bf16.msra.mxu0 0
        %575 = vmatpush.bf16.msra.mxu0 0
        %576 = vmatpush.bf16.msra.mxu0 0
        %577 = vmatpush.bf16.msra.mxu0 0
        %578 = vmatpush.bf16.msra.mxu0 0
        %579 = vmatpush.bf16.msra.mxu0 0
        %580 = vmatpush.bf16.msra.mxu0 0
        %581 = vmatpush.bf16.msra.mxu0 %v569
        %582 = vmatmul.bf16.gmra.mxu0 %v572
        %v583 = vpop.f32.mrf.mxu0
        %v584 = vadd.f32 0.0, %v583
        %v585 = vpop.f32.mrf.mxu0
        %v586 = vadd.f32 0.0, %v585
        %587 = vdwg.mxu0
        %588 = vrot.lane.b32.xlu0 %v386, 104
        %v589 = vpop.permute.xlu0 %588
        %590 = vrot.lane.b32.xlu0 %v386, 72
        %v591 = vpop.permute.xlu0 %590
        %v593 = vsel %vm389, %v589, 0
        %v596 = vsel %vm389, %v591, 0
        %598 = vmatpush.bf16.xpose.msra.mxu0 0
        %599 = vmatpush.bf16.xpose.msra.mxu0 0
        %600 = vmatpush.bf16.xpose.msra.mxu0 0
        %601 = vmatpush.bf16.xpose.msra.mxu0 0
        %602 = vmatpush.bf16.xpose.msra.mxu0 0
        %603 = vmatpush.bf16.xpose.msra.mxu0 0
        %604 = vmatpush.bf16.xpose.msra.mxu0 0
        %605 = vmatpush.bf16.xpose.msra.mxu0 %v596
        %606 = vmatmul.bf16.gmra.mxu0 %v593
        %v607 = vpop.f32.mrf.mxu0
        %v608 = vadd.f32 %v379, %v607
        %v609 = vpop.f32.mrf.mxu0
        %v610 = vadd.f32 %v379, %v609
        %611 = vdwg.mxu0
        %v612 = vsel %vm410, %v608, -inf
        %613 = vmax.xlane.f32.xlu0 %v612
        %v614 = vpop.xlane.xlu0 %613
        %v615 = vsel %vm410, %v610, -inf
        %616 = vmax.xlane.f32.xlu0 %v615
        %v617 = vpop.xlane.xlu0 %616
        %v618 = vsub.f32 %v608, %v614
        %v619 = vsub.f32 %v610, %v617
        %v620 = vmul.f32 %v618, 1.442695
        %v621 = vpow.pop %v620
        %v622 = vmul.f32 %v619, 1.442695
        %v623 = vpow.pop %v622
        %v624 = vsel %vm410, %v621, 0.0
        %625 = vadd.xlane.f32.xlu0 %v624
        %v626 = vpop.xlane.xlu0 %625
        %v627 = vsel %vm410, %v623, 0.0
        %628 = vadd.xlane.f32.xlu0 %v627
        %v629 = vpop.xlane.xlu0 %628
        %v630 = vrcp.pop %v626
        %v631 = vrcp.pop %v629
        %v632 = vmul.f32 %v621, %v630
        %v633 = vmul.f32 %v623, %v631
        %v634 = vpack.c.bf16 %v633, %v632
        %635 = vrot.lane.b32.xlu0 %v386, 40
        %v636 = vpop.permute.xlu0 %635
        %v639 = vsel %vm410, %v634, 0
        %641 = vmatpush.bf16.msra.mxu0 0
        %642 = vmatpush.bf16.msra.mxu0 0
        %643 = vmatpush.bf16.msra.mxu0 0
        %644 = vmatpush.bf16.msra.mxu0 0
        %645 = vmatpush.bf16.msra.mxu0 0
        %646 = vmatpush.bf16.msra.mxu0 0
        %647 = vmatpush.bf16.msra.mxu0 0
        %648 = vmatpush.bf16.msra.mxu0 %v636
        %649 = vmatmul.bf16.gmra.mxu0 %v639
        %v650 = vpop.f32.mrf.mxu0
        %v651 = vadd.f32 0.0, %v650
        %v652 = vpop.f32.mrf.mxu0
        %v653 = vadd.f32 0.0, %v652
        %654 = vdwg.mxu0
        %657 = vrot.lane.b32.xlu0 %v517, 8
        %v658 = vpop.permute.xlu0 %657
        %659 = vrot.lane.b32.xlu0 %v519, 8
        %v660 = vpop.permute.xlu0 %659
        %665 = vrot.lane.b32.xlu0 %v584, 16
        %v666 = vpop.permute.xlu0 %665
        %667 = vrot.lane.b32.xlu0 %v586, 16
        %v668 = vpop.permute.xlu0 %667
        %673 = vrot.lane.b32.xlu0 %v651, 24
        %v674 = vpop.permute.xlu0 %673
        %675 = vrot.lane.b32.xlu0 %v653, 24
        %v676 = vpop.permute.xlu0 %675
        %v679 = vsel %vm389, %v450, %v658
        %v680 = vsel %vm389, %v452, %v660
        %v681 = vsel %vm410, %v679, %v666
        %v682 = vsel %vm410, %v680, %v668
        %vm683 = vcmask 195584
        %v684 = vsel %vm683, %v681, %v674
        %v685 = vsel %vm683, %v682, %v676
        %v686 = vpack.c.bf16 %v684, %v684
        %v687 = vpack.c.bf16 %v685, %v685
        %vm688 = vcmask 257024
        %689 = vst.msk [vmem:[#allocation3] sm:$0xf] %vm688, %v686
        %690 = vst.msk [vmem:[#allocation3 + $0x4] sm:$0xf] %vm688, %v687
        %v691 = vld [vmem:[#allocation3] sm:$0xf]
        %v692 = vld [vmem:[#allocation3 + $0x4] sm:$0xf]
        %v693 = vld [vmem:[#allocation9] sm:$0xf]
        %v694 = vld [vmem:[#allocation9 + $0x4] sm:$0xf]
        %v695 = vld [vmem:[#allocation9 + $0x8] sm:$0xf]
        %v696 = vld [vmem:[#allocation9 + $0xc] sm:$0xf]
        %v697 = vld [vmem:[%s4] sm:$0x1]
        %v699 = vperm.slane %v697, 0
        %v703 = vunpack.c.l.b16 %v691
        %v704 = vunpack.c.l.b16 %v692
        %v705 = vpack.c.b16 %v704, %v703
        %v710 = vunpack.c.l.b16 %v693
        %v711 = vunpack.c.l.b16 %v694
        %v712 = vunpack.c.l.b16 %v695
        %v713 = vunpack.c.l.b16 %v696
        %v714 = vpack.c.b16 %v711, %v710
        %v715 = vpack.c.b16 %v713, %v712
        %v719 = vsel %vm281, %v705, 0
        %721 = vmatpush.bf16.msra.mxu0 0
        %722 = vmatpush.bf16.msra.mxu0 0
        %723 = vmatpush.bf16.msra.mxu0 0
        %724 = vmatpush.bf16.msra.mxu0 0
        %725 = vmatpush.bf16.msra.mxu0 0
        %726 = vmatpush.bf16.msra.mxu0 0
        %727 = vmatpush.bf16.msra.mxu0 %v715
        %728 = vmatpush.bf16.msra.mxu0 %v714
        %729 = vmatmul.bf16.gmra.mxu0 %v719
        %v730 = vpop.f32.mrf.mxu0
        %v731 = vadd.f32 %v699, %v730
        %v732 = vpop.f32.mrf.mxu0
        %v733 = vadd.f32 %v699, %v732
        %734 = vdwg.mxu0
        %735 = vst.msk [vmem:[%s277] sm:$0xff] %vm281, %v731
        %736 = vst.msk [vmem:[%s277 + $0x8] sm:$0xff] %vm281, %v733
        %s737 = sand.u32 %s141, 1
        %s738 = scalar_lea.sflag [#allocation6], %s737
        %s739 = sand.u32 %s141, 1
        %s740 = smul.addr %s739, 16
        %s741 = scalar_lea.vmem [#allocation10], %s740
        // Predicated region
        $region53: #{tpu_custom_call.1} parent=39 // pred_check
          %p742 = pneg %p151
        $region54: #{tpu_custom_call.1} parent=39 // pred_check_branch
          %744 = sbr.rel (%p742) target = $region56
        $region55: #{tpu_custom_call.1} parent=39 // pred_region
          %746 = vsyncadd %s738, 0
          %s747 = smul.addr %s23, 2
          %s748 = smul.addr %s747, 8
          %s749 = scalar_lea.hbm %s5, %s748
          %s750 = sshll.u32 %s741, 4
          %s751 = int_to_ptr.vmem [resolvable:$true] %s750
          %s752 = sshll.u32 %s749, 4
          %s753 = int_to_ptr.hbm [resolvable:$true] %s752
          %758 = dma.vmem_to_hbm [thread:$0]  %s751, 256, %s753, %s738, 128, 128, 8
        $region56: #{tpu_custom_call.1} parent=39 // pred_fallthru
          _
      $region40: #{tpu_custom_call.1} parent=5 // pred_fallthru
        _
      %p759 = scmp.le.s32.totalorder 2, %s18
      // Predicated region
      $region57: #{tpu_custom_call.1} parent=5 // pred_check
        %p760 = pneg %p759
      $region58: #{tpu_custom_call.1} parent=5 // pred_check_branch
        %762 = sbr.rel (%p760) target = $region60
      $region59: #{tpu_custom_call.1} parent=5 // pred_region
        %s763 = ssub.s32 %s18, 2
        // Predicated region
        $region61: #{tpu_custom_call.1} parent=59 // pred_check
          %p764 = pneg %p157
        $region62: #{tpu_custom_call.1} parent=59 // pred_check_branch
          %766 = sbr.rel (%p764) target = $region64
        $region63: #{tpu_custom_call.1} parent=59 // pred_region
          %s767 = sand.u32 %s142, 1
          %s768 = scalar_lea.sflag [#allocation6], %s767
          %s769 = sand.u32 %s142, 1
          %s770 = smul.addr %s769, 16
          %s771 = scalar_lea.vmem [#allocation10], %s770
          %773 = dma.done %s768, 256
        $region64: #{tpu_custom_call.1} parent=59 // pred_fallthru
          _
      $region60: #{tpu_custom_call.1} parent=5 // pred_fallthru
        _
    $region6: #{tpu_custom_call.1} parent=1 // loop_footer
      %s22 = sadd.s32 1, %s18
    $region7: #{tpu_custom_call.1} parent=1 // loop_footer_branch
      %17 = sbr.rel target = $region3
    $region8: #{tpu_custom_call.1} parent=1 // loop_exit
      _
    %774 = vsyncpa [#allocation5], 1
    %s775 = scalar_lea.sflag [#allocation5], 1
    %776 = vsyncpa %s775, 1
    %777 = vsyncpa [#allocation8], 1
    %778 = vsyncpa [#allocation6], 1
    %s779 = scalar_lea.sflag [#allocation6], 1
    %780 = vsyncpa %s779, 1

</llo_original>
